<compile_context>
chip_gen: v7x
topology: tpu7x:2x2x1
jax: 0.10.0
libtpu: 0.0.40
codegen_flags: <defaults>
</compile_context>

<pallas_src>
import functools
import math

import jax
import jax.numpy as jnp
from jax.experimental import pallas as pl
from jax.experimental.pallas import tpu as pltpu


def _round_up(x, m):
    return ((x + m - 1) // m) * m


# ------------------------------ fused kernel ------------------------------

def _classifier_kernel(cls_ref, ln_w_ref, ln_b_ref, w1_ref, b1_ref,
                       w2_ref, b2_ref, wo_ref, bo_ref, o_ref, *,
                       eps, n_vars, d_model):
    """Fused LayerNorm + MLP (exact-erf GELU) + residual + classifier head.

    cls_ref : (TB, I*D) bf16  cls tokens, lanes flattened (i-major, d-minor)
    w1_ref  : (D, Dh) bf16    w2_ref : (Dh, D) bf16    wo_ref : (I*D, Cp) bf16
    o_ref   : (TB, Cp)        logits (Cp = num_class padded to 128 lanes)
    """
    I, D = n_vars, d_model
    tb = o_ref.shape[0]

    x_flat = cls_ref[...].astype(jnp.float32)                      # (TB, I*D)

    # lanes -> rows: one merged (I*TB, D) slab so LN/fc1/GELU/fc2 run once with
    # an I-times larger M (fewer MXU push/drain boundaries, no per-var unroll).
    x = jnp.concatenate(
        [x_flat[:, i * D:(i + 1) * D] for i in range(I)], axis=0)  # (I*TB, D)

    # LayerNorm (f32 stats, biased variance) == nn.LayerNorm(eps=1e-5)
    mu = jnp.mean(x, axis=-1, keepdims=True)
    xc = x - mu
    var = jnp.mean(xc * xc, axis=-1, keepdims=True)
    xn = xc * jax.lax.rsqrt(var + eps) * ln_w_ref[...] + ln_b_ref[...]

    # fc1 + exact (erf) GELU, matching torch.nn.GELU(approximate='none')
    h = jnp.dot(xn.astype(jnp.bfloat16), w1_ref[...],
                preferred_element_type=jnp.float32) + b1_ref[...]
    h = 0.5 * h * (1.0 + jax.lax.erf(h * (1.0 / math.sqrt(2.0))))

    # fc2 + residual
    y = jnp.dot(h.astype(jnp.bfloat16), w2_ref[...],
                preferred_element_type=jnp.float32) + b2_ref[...]
    z = x + y                                                       # (I*TB, D)

    # rows -> lanes: rebuild the (TB, I*D) flatten order of `reshape(B, -1)`
    z_flat = jnp.concatenate(
        [z[i * tb:(i + 1) * tb, :] for i in range(I)], axis=-1)     # (TB, I*D)

    # classifier head: one full-K GEMM (K = I*D) against the flat weight
    logits = jnp.dot(z_flat.astype(jnp.bfloat16), wo_ref[...],
                     preferred_element_type=jnp.float32) + bo_ref[...]
    o_ref[...] = logits.astype(o_ref.dtype)


# ------------------------------ wrapper ------------------------------

def _weight_spec(shape, single_buffer):
    idx = lambda b: (0,) * len(shape)
    if single_buffer:
        # Constant index_map -> no re-DMA across grid steps; single buffering
        # avoids paying 2x VMEM for weights that never change.
        return pl.BlockSpec(shape, idx, pipeline_mode=pl.Buffered(1))
    return pl.BlockSpec(shape, idx)


def classifier_forward(params, h, *, batch_tile=512, single_buffer_weights=True):
    """h : (B, I, T, D)  ->  logits (B, num_class)."""
    B, I, T, D = h.shape
    Dh = params["fc1_w"].shape[1]
    C = params["out_b"].shape[0]
    Cp = _round_up(C, 128)          # lane-dense output columns
    eps = 1e-5

    # cls token: contiguous slice + free reshape (no HBM transpose/relayout),
    # streamed to the kernel in bf16 (only tensor re-DMA'd every grid step).
    cls = h[:, :, 0, :].astype(jnp.bfloat16).reshape(B, I * D)

    # Batch tile: multiple of 8 sublanes; once the batch is big enough, make the
    # grid >= 2 steps so ("parallel",) can shard across v7x's two TensorCores.
    B_aligned = _round_up(B, 8)
    TB = min(batch_tile, B_aligned)
    if 32 <= B_aligned <= batch_tile:
        TB = _round_up(pl.cdiv(B_aligned, 2), 8)
    grid_b = pl.cdiv(B, TB)
    B_pad = grid_b * TB
    if B_pad != B:
        cls = jnp.pad(cls, ((0, B_pad - B), (0, 0)))   # zero rows -> finite LN

    # Pre-cast MXU weights to bf16 and pad the head to lane-dense Cp columns.
    # TODO(synk): in a real model these casts/pads would be done once at load time.
    w1 = params["fc1_w"].astype(jnp.bfloat16)
    w2 = params["fc2_w"].astype(jnp.bfloat16)
    wo = jnp.pad(params["out_w"].astype(jnp.bfloat16), ((0, 0), (0, Cp - C)))
    ln_w = params["ln_w"].reshape(1, D)
    ln_b = params["ln_b"].reshape(1, D)
    b1 = params["fc1_b"].reshape(1, Dh)
    b2 = params["fc2_b"].reshape(1, D)
    bo = jnp.pad(params["out_b"], (0, Cp - C)).reshape(1, Cp)

    kernel = functools.partial(_classifier_kernel, eps=eps, n_vars=I, d_model=D)
    sb = single_buffer_weights

    out = pl.pallas_call(
        kernel,
        out_shape=jax.ShapeDtypeStruct((B_pad, Cp), h.dtype),
        grid_spec=pltpu.PrefetchScalarGridSpec(
            num_scalar_prefetch=0,
            grid=(grid_b,),
            in_specs=[
                pl.BlockSpec((TB, I * D), lambda b: (b, 0)),   # cls (bf16 stream)
                _weight_spec((1, D), sb),                      # ln_w
                _weight_spec((1, D), sb),                      # ln_b
                _weight_spec((D, Dh), sb),                     # fc1_w (bf16)
                _weight_spec((1, Dh), sb),                     # fc1_b
                _weight_spec((Dh, D), sb),                     # fc2_w (bf16)
                _weight_spec((1, D), sb),                      # fc2_b
                _weight_spec((I * D, Cp), sb),                 # out_w (bf16, padded)
                _weight_spec((1, Cp), sb),                     # out_b (padded)
            ],
            out_specs=pl.BlockSpec((TB, Cp), lambda b: (b, 0)),
        ),
        compiler_params=pltpu.CompilerParams(
            dimension_semantics=("parallel",),
            # Working set at TB=512 is only a few MiB; 32 MiB scoped VMEM is
            # safe on v5e/v6e (128 MiB physical) and v7x (64 MiB physical).
            vmem_limit_bytes=32 * 1024 * 1024,
        ),
    )(cls, ln_w, ln_b, w1, b1, w2, b2, wo, bo)

    return out[:B, :C]


# ------------------------------ parameters ------------------------------

def init_params(key, d_model, input_dim, num_class, mlp_ratio=4):
    D = d_model
    Dh = int(D * mlp_ratio)
    ks = jax.random.split(key, 6)

    def normal(k, shape, std=0.02):
        return std * jax.random.normal(k, shape, dtype=jnp.float32)

    return {
        "ln_w": jnp.ones((D,), jnp.float32),
        "ln_b": jnp.zeros((D,), jnp.float32),
        "fc1_w": normal(ks[0], (D, Dh)),
        "fc1_b": normal(ks[1], (Dh,), std=0.01),
        "fc2_w": normal(ks[2], (Dh, D)),
        "fc2_b": normal(ks[3], (D,), std=0.01),
        "out_w": normal(ks[4], (input_dim * D, num_class)),
        "out_b": normal(ks[5], (num_class,), std=0.01),
    }


# ------------------------------ reference (plain JAX, f32) ------------------------------

def classifier_ref(params, h):
    B, I, T, D = h.shape
    x = h[:, :, 0, :]                                             # (B, I, D)
    mu = jnp.mean(x, axis=-1, keepdims=True)
    var = jnp.mean((x - mu) ** 2, axis=-1, keepdims=True)
    xn = (x - mu) / jnp.sqrt(var + 1e-5) * params["ln_w"] + params["ln_b"]
    hid = xn @ params["fc1_w"] + params["fc1_b"]
    hid = 0.5 * hid * (1.0 + jax.lax.erf(hid / jnp.sqrt(2.0)))
    y = hid @ params["fc2_w"] + params["fc2_b"]
    z = x + y
    return z.reshape(B, I * D) @ params["out_w"] + params["out_b"]


# ------------------------------ demo ------------------------------

if __name__ == "__main__":
    # config implied by the module family: d_model=32, input_dim=4, T = max_len+1 = 9,
    # num_class=10; dropout -> identity at inference.
    B, I, T, D = 2, 4, 9, 32
    num_class = 10

    key = jax.random.PRNGKey(0)
    kh, kp = jax.random.split(key)
    h = jax.random.normal(kh, (B, I, T, D), dtype=jnp.float32)
    params = init_params(kp, D, I, num_class)

    fwd = jax.jit(classifier_forward,
                  static_argnames=("batch_tile", "single_buffer_weights"))
    try:
        logits = jax.block_until_ready(fwd(params, h))
    except Exception:
        # Fallback if this JAX build rejects pl.Buffered(1) on pallas_call in_specs.
        logits = jax.block_until_ready(fwd(params, h, single_buffer_weights=False))

    assert logits.shape == (B, num_class), logits.shape
    assert bool(jnp.all(jnp.isfinite(logits)))

    # correctness vs. plain-JAX f32 reference (bf16 MXU operands -> loose tolerance)
    ref = classifier_ref(params, h)
    assert bool(jnp.allclose(logits, ref, atol=5e-2, rtol=5e-2)), (
        float(jnp.max(jnp.abs(logits - ref))))

    print("KERNEL_OK")
</pallas_src>

<mosaic_0001>
module attributes {stable_mosaic.version = 11 : i64} {
  func.func @_classifier_kernel(%arg0: i32, %arg1: memref<8x128xbf16, #tpu.memory_space<vmem>>, %arg2: memref<1x32xf32, #tpu.memory_space<vmem>>, %arg3: memref<1x32xf32, #tpu.memory_space<vmem>>, %arg4: memref<32x128xbf16, #tpu.memory_space<vmem>>, %arg5: memref<1x128xf32, #tpu.memory_space<vmem>>, %arg6: memref<128x32xbf16, #tpu.memory_space<vmem>>, %arg7: memref<1x32xf32, #tpu.memory_space<vmem>>, %arg8: memref<128x128xbf16, #tpu.memory_space<vmem>>, %arg9: memref<1x128xf32, #tpu.memory_space<vmem>>, %arg10: memref<8x128xf32, #tpu.memory_space<vmem>>) attributes {dimension_semantics = [#tpu.dimension_semantics<parallel>], iteration_bounds = array<i64: 1>, scalar_prefetch = 0 : i64, scratch_operands = 0 : i64, tpu.core_type = #tpu.core_type<tc>, window_params = [{transform_indices = @transform_0, window_bounds = array<i64: 8, 128>}, {pipeline_mode = #tpu.pipeline_mode<synchronous>, transform_indices = @transform_1, window_bounds = array<i64: 1, 32>}, {pipeline_mode = #tpu.pipeline_mode<synchronous>, transform_indices = @transform_2, window_bounds = array<i64: 1, 32>}, {pipeline_mode = #tpu.pipeline_mode<synchronous>, transform_indices = @transform_3, window_bounds = array<i64: 32, 128>}, {pipeline_mode = #tpu.pipeline_mode<synchronous>, transform_indices = @transform_4, window_bounds = array<i64: 1, 128>}, {pipeline_mode = #tpu.pipeline_mode<synchronous>, transform_indices = @transform_5, window_bounds = array<i64: 128, 32>}, {pipeline_mode = #tpu.pipeline_mode<synchronous>, transform_indices = @transform_6, window_bounds = array<i64: 1, 32>}, {pipeline_mode = #tpu.pipeline_mode<synchronous>, transform_indices = @transform_7, window_bounds = array<i64: 128, 128>}, {pipeline_mode = #tpu.pipeline_mode<synchronous>, transform_indices = @transform_8, window_bounds = array<i64: 1, 128>}, {transform_indices = @transform_9, window_bounds = array<i64: 8, 128>}]} {
    %c0 = arith.constant 0 : index
    %c0_0 = arith.constant 0 : index
    %0 = vector.load %arg1[%c0, %c0_0] : memref<8x128xbf16, #tpu.memory_space<vmem>>, vector<8x128xbf16>
    %1 = arith.extf %0 : vector<8x128xbf16> to vector<8x128xf32>
    %2 = vector.extract_strided_slice %1 {offsets = [0, 0], sizes = [8, 32], strides = [1, 1]} : vector<8x128xf32> to vector<8x32xf32>
    %3 = vector.extract_strided_slice %1 {offsets = [0, 32], sizes = [8, 32], strides = [1, 1]} : vector<8x128xf32> to vector<8x32xf32>
    %4 = vector.extract_strided_slice %1 {offsets = [0, 64], sizes = [8, 32], strides = [1, 1]} : vector<8x128xf32> to vector<8x32xf32>
    %5 = vector.extract_strided_slice %1 {offsets = [0, 96], sizes = [8, 32], strides = [1, 1]} : vector<8x128xf32> to vector<8x32xf32>
    %6 = tpu.concatenate %2, %3, %4, %5 in 0 : vector<8x32xf32>, vector<8x32xf32>, vector<8x32xf32>, vector<8x32xf32> -> vector<32x32xf32>
    %cst = arith.constant dense<0.000000e+00> : vector<32xf32>
    %7 = vector.multi_reduction <add>, %6, %cst [1] : vector<32x32xf32> to vector<32xf32>
    %8 = vector.shape_cast %7 : vector<32xf32> to vector<32x1xf32>
    %cst_1 = arith.constant 3.200000e+01 : f32
    %9 = vector.broadcast %cst_1 : f32 to vector<32x1xf32>
    %10 = arith.divf %8, %9 : vector<32x1xf32>
    %11 = vector.broadcast %10 : vector<32x1xf32> to vector<32x32xf32>
    %12 = arith.subf %6, %11 : vector<32x32xf32>
    %13 = arith.mulf %12, %12 : vector<32x32xf32>
    %cst_2 = arith.constant dense<0.000000e+00> : vector<32xf32>
    %14 = vector.multi_reduction <add>, %13, %cst_2 [1] : vector<32x32xf32> to vector<32xf32>
    %15 = vector.shape_cast %14 : vector<32xf32> to vector<32x1xf32>
    %cst_3 = arith.constant 3.200000e+01 : f32
    %16 = vector.broadcast %cst_3 : f32 to vector<32x1xf32>
    %17 = arith.divf %15, %16 : vector<32x1xf32>
    %cst_4 = arith.constant 9.99999974E-6 : f32
    %18 = vector.broadcast %cst_4 : f32 to vector<32x1xf32>
    %19 = arith.addf %17, %18 : vector<32x1xf32>
    %20 = math.rsqrt %19 : vector<32x1xf32>
    %21 = vector.broadcast %20 : vector<32x1xf32> to vector<32x32xf32>
    %22 = arith.mulf %12, %21 : vector<32x32xf32>
    %c0_5 = arith.constant 0 : index
    %c0_6 = arith.constant 0 : index
    %23 = vector.load %arg2[%c0_5, %c0_6] : memref<1x32xf32, #tpu.memory_space<vmem>>, vector<1x32xf32>
    %24 = vector.broadcast %23 : vector<1x32xf32> to vector<32x32xf32>
    %25 = arith.mulf %22, %24 : vector<32x32xf32>
    %c0_7 = arith.constant 0 : index
    %c0_8 = arith.constant 0 : index
    %26 = vector.load %arg3[%c0_7, %c0_8] : memref<1x32xf32, #tpu.memory_space<vmem>>, vector<1x32xf32>
    %27 = vector.broadcast %26 : vector<1x32xf32> to vector<32x32xf32>
    %28 = arith.addf %25, %27 : vector<32x32xf32>
    %29 = arith.truncf %28 : vector<32x32xf32> to vector<32x32xbf16>
    %c0_9 = arith.constant 0 : index
    %c0_10 = arith.constant 0 : index
    %30 = vector.load %arg4[%c0_9, %c0_10] : memref<32x128xbf16, #tpu.memory_space<vmem>>, vector<32x128xbf16>
    %cst_11 = arith.constant dense<0.000000e+00> : vector<32x128xf32>
    %31 = tpu.matmul %29, %30, %cst_11 {dimension_numbers = #tpu.dot_dimension_numbers<[1], [0], [0], [1], [0, 0, 1, 1], [], []>} : vector<32x32xbf16>, vector<32x128xbf16>, vector<32x128xf32> -> vector<32x128xf32>
    %c0_12 = arith.constant 0 : index
    %c0_13 = arith.constant 0 : index
    %32 = vector.load %arg5[%c0_12, %c0_13] : memref<1x128xf32, #tpu.memory_space<vmem>>, vector<1x128xf32>
    %33 = vector.broadcast %32 : vector<1x128xf32> to vector<32x128xf32>
    %34 = arith.addf %31, %33 : vector<32x128xf32>
    %cst_14 = arith.constant 5.000000e-01 : f32
    %35 = vector.broadcast %cst_14 : f32 to vector<32x128xf32>
    %36 = arith.mulf %35, %34 : vector<32x128xf32>
    %cst_15 = arith.constant 0.707106769 : f32
    %37 = vector.broadcast %cst_15 : f32 to vector<32x128xf32>
    %38 = arith.mulf %34, %37 : vector<32x128xf32>
    %39 = math.erf %38 : vector<32x128xf32>
    %cst_16 = arith.constant 1.000000e+00 : f32
    %40 = vector.broadcast %cst_16 : f32 to vector<32x128xf32>
    %41 = arith.addf %40, %39 : vector<32x128xf32>
    %42 = arith.mulf %36, %41 : vector<32x128xf32>
    %43 = arith.truncf %42 : vector<32x128xf32> to vector<32x128xbf16>
    %c0_17 = arith.constant 0 : index
    %c0_18 = arith.constant 0 : index
    %44 = vector.load %arg6[%c0_17, %c0_18] : memref<128x32xbf16, #tpu.memory_space<vmem>>, vector<128x32xbf16>
    %cst_19 = arith.constant dense<0.000000e+00> : vector<32x32xf32>
    %45 = tpu.matmul %43, %44, %cst_19 {dimension_numbers = #tpu.dot_dimension_numbers<[1], [0], [0], [1], [0, 0, 1, 1], [], []>} : vector<32x128xbf16>, vector<128x32xbf16>, vector<32x32xf32> -> vector<32x32xf32>
    %c0_20 = arith.constant 0 : index
    %c0_21 = arith.constant 0 : index
    %46 = vector.load %arg7[%c0_20, %c0_21] : memref<1x32xf32, #tpu.memory_space<vmem>>, vector<1x32xf32>
    %47 = vector.broadcast %46 : vector<1x32xf32> to vector<32x32xf32>
    %48 = arith.addf %45, %47 : vector<32x32xf32>
    %49 = arith.addf %6, %48 : vector<32x32xf32>
    %50 = vector.extract_strided_slice %49 {offsets = [0, 0], sizes = [8, 32], strides = [1, 1]} : vector<32x32xf32> to vector<8x32xf32>
    %51 = vector.extract_strided_slice %49 {offsets = [8, 0], sizes = [8, 32], strides = [1, 1]} : vector<32x32xf32> to vector<8x32xf32>
    %52 = vector.extract_strided_slice %49 {offsets = [16, 0], sizes = [8, 32], strides = [1, 1]} : vector<32x32xf32> to vector<8x32xf32>
    %53 = vector.extract_strided_slice %49 {offsets = [24, 0], sizes = [8, 32], strides = [1, 1]} : vector<32x32xf32> to vector<8x32xf32>
    %54 = tpu.concatenate %50, %51, %52, %53 in 1 : vector<8x32xf32>, vector<8x32xf32>, vector<8x32xf32>, vector<8x32xf32> -> vector<8x128xf32>
    %55 = arith.truncf %54 : vector<8x128xf32> to vector<8x128xbf16>
    %c0_22 = arith.constant 0 : index
    %c0_23 = arith.constant 0 : index
    %56 = vector.load %arg8[%c0_22, %c0_23] : memref<128x128xbf16, #tpu.memory_space<vmem>>, vector<128x128xbf16>
    %cst_24 = arith.constant dense<0.000000e+00> : vector<8x128xf32>
    %57 = tpu.matmul %55, %56, %cst_24 {dimension_numbers = #tpu.dot_dimension_numbers<[1], [0], [0], [1], [0, 0, 1, 1], [], []>} : vector<8x128xbf16>, vector<128x128xbf16>, vector<8x128xf32> -> vector<8x128xf32>
    %c0_25 = arith.constant 0 : index
    %c0_26 = arith.constant 0 : index
    %58 = vector.load %arg9[%c0_25, %c0_26] : memref<1x128xf32, #tpu.memory_space<vmem>>, vector<1x128xf32>
    %59 = vector.broadcast %58 : vector<1x128xf32> to vector<8x128xf32>
    %60 = arith.addf %57, %59 : vector<8x128xf32>
    %c0_27 = arith.constant 0 : index
    %c0_28 = arith.constant 0 : index
    %61 = vector.load %arg10[%c0_27, %c0_28] : memref<8x128xf32, #tpu.memory_space<vmem>>, vector<8x128xf32>
    tpu.vector_store %arg10[%c0_27, %c0_28], %60 {strides = array<i32>} : memref<8x128xf32, #tpu.memory_space<vmem>>, vector<8x128xf32>,
    return
  }
  func.func @transform_0(%arg0: i32) -> (i32, i32) {
    %c0_i32 = arith.constant 0 : i32
    %c0_i32_0 = arith.constant 0 : i32
    return %arg0, %c0_i32 : i32, i32
  }
  func.func @transform_1(%arg0: i32) -> (i32, i32) {
    %c0_i32 = arith.constant 0 : i32
    %c0_i32_0 = arith.constant 0 : i32
    %c0_i32_1 = arith.constant 0 : i32
    return %c0_i32, %c0_i32_0 : i32, i32
  }
  func.func @transform_2(%arg0: i32) -> (i32, i32) {
    %c0_i32 = arith.constant 0 : i32
    %c0_i32_0 = arith.constant 0 : i32
    %c0_i32_1 = arith.constant 0 : i32
    return %c0_i32, %c0_i32_0 : i32, i32
  }
  func.func @transform_3(%arg0: i32) -> (i32, i32) {
    %c0_i32 = arith.constant 0 : i32
    %c0_i32_0 = arith.constant 0 : i32
    %c0_i32_1 = arith.constant 0 : i32
    return %c0_i32, %c0_i32_0 : i32, i32
  }
  func.func @transform_4(%arg0: i32) -> (i32, i32) {
    %c0_i32 = arith.constant 0 : i32
    %c0_i32_0 = arith.constant 0 : i32
    %c0_i32_1 = arith.constant 0 : i32
    return %c0_i32, %c0_i32_0 : i32, i32
  }
  func.func @transform_5(%arg0: i32) -> (i32, i32) {
    %c0_i32 = arith.constant 0 : i32
    %c0_i32_0 = arith.constant 0 : i32
    %c0_i32_1 = arith.constant 0 : i32
    return %c0_i32, %c0_i32_0 : i32, i32
  }
  func.func @transform_6(%arg0: i32) -> (i32, i32) {
    %c0_i32 = arith.constant 0 : i32
    %c0_i32_0 = arith.constant 0 : i32
    %c0_i32_1 = arith.constant 0 : i32
    return %c0_i32, %c0_i32_0 : i32, i32
  }
  func.func @transform_7(%arg0: i32) -> (i32, i32) {
    %c0_i32 = arith.constant 0 : i32
    %c0_i32_0 = arith.constant 0 : i32
    %c0_i32_1 = arith.constant 0 : i32
    return %c0_i32, %c0_i32_0 : i32, i32
  }
  func.func @transform_8(%arg0: i32) -> (i32, i32) {
    %c0_i32 = arith.constant 0 : i32
    %c0_i32_0 = arith.constant 0 : i32
    %c0_i32_1 = arith.constant 0 : i32
    return %c0_i32, %c0_i32_0 : i32, i32
  }
  func.func @transform_9(%arg0: i32) -> (i32, i32) {
    %c0_i32 = arith.constant 0 : i32
    %c0_i32_0 = arith.constant 0 : i32
    return %arg0, %c0_i32 : i32, i32
  }
}

module attributes {stable_mosaic.version = 11 : i64} {
  func.func @_classifier_kernel(%arg0: i32, %arg1: memref<8x128xbf16, #tpu.memory_space<vmem>>, %arg2: memref<1x32xf32, #tpu.memory_space<vmem>>, %arg3: memref<1x32xf32, #tpu.memory_space<vmem>>, %arg4: memref<32x128xbf16, #tpu.memory_space<vmem>>, %arg5: memref<1x128xf32, #tpu.memory_space<vmem>>, %arg6: memref<128x32xbf16, #tpu.memory_space<vmem>>, %arg7: memref<1x32xf32, #tpu.memory_space<vmem>>, %arg8: memref<128x128xbf16, #tpu.memory_space<vmem>>, %arg9: memref<1x128xf32, #tpu.memory_space<vmem>>, %arg10: memref<8x128xf32, #tpu.memory_space<vmem>>) attributes {dimension_semantics = [#tpu.dimension_semantics<parallel>], iteration_bounds = array<i64: 1>, scalar_prefetch = 0 : i64, scratch_operands = 0 : i64, tpu.core_type = #tpu.core_type<tc>, window_params = [{transform_indices = @transform_0, window_bounds = array<i64: 8, 128>}, {pipeline_mode = #tpu.pipeline_mode<synchronous>, transform_indices = @transform_1, window_bounds = array<i64: 1, 32>}, {pipeline_mode = #tpu.pipeline_mode<synchronous>, transform_indices = @transform_2, window_bounds = array<i64: 1, 32>}, {pipeline_mode = #tpu.pipeline_mode<synchronous>, transform_indices = @transform_3, window_bounds = array<i64: 32, 128>}, {pipeline_mode = #tpu.pipeline_mode<synchronous>, transform_indices = @transform_4, window_bounds = array<i64: 1, 128>}, {pipeline_mode = #tpu.pipeline_mode<synchronous>, transform_indices = @transform_5, window_bounds = array<i64: 128, 32>}, {pipeline_mode = #tpu.pipeline_mode<synchronous>, transform_indices = @transform_6, window_bounds = array<i64: 1, 32>}, {pipeline_mode = #tpu.pipeline_mode<synchronous>, transform_indices = @transform_7, window_bounds = array<i64: 128, 128>}, {pipeline_mode = #tpu.pipeline_mode<synchronous>, transform_indices = @transform_8, window_bounds = array<i64: 1, 128>}, {transform_indices = @transform_9, window_bounds = array<i64: 8, 128>}]} {
    %c0 = arith.constant 0 : index
    %c0_0 = arith.constant 0 : index
    %0 = vector.load %arg1[%c0, %c0_0] : memref<8x128xbf16, #tpu.memory_space<vmem>>, vector<8x128xbf16>
    %1 = arith.extf %0 : vector<8x128xbf16> to vector<8x128xf32>
    %2 = vector.extract_strided_slice %1 {offsets = [0, 0], sizes = [8, 32], strides = [1, 1]} : vector<8x128xf32> to vector<8x32xf32>
    %3 = vector.extract_strided_slice %1 {offsets = [0, 32], sizes = [8, 32], strides = [1, 1]} : vector<8x128xf32> to vector<8x32xf32>
    %4 = vector.extract_strided_slice %1 {offsets = [0, 64], sizes = [8, 32], strides = [1, 1]} : vector<8x128xf32> to vector<8x32xf32>
    %5 = vector.extract_strided_slice %1 {offsets = [0, 96], sizes = [8, 32], strides = [1, 1]} : vector<8x128xf32> to vector<8x32xf32>
    %6 = tpu.concatenate %2, %3, %4, %5 in 0 : vector<8x32xf32>, vector<8x32xf32>, vector<8x32xf32>, vector<8x32xf32> -> vector<32x32xf32>
    %cst = arith.constant dense<0.000000e+00> : vector<32xf32>
    %7 = vector.multi_reduction <add>, %6, %cst [1] : vector<32x32xf32> to vector<32xf32>
    %8 = vector.shape_cast %7 : vector<32xf32> to vector<32x1xf32>
    %cst_1 = arith.constant 3.200000e+01 : f32
    %9 = vector.broadcast %cst_1 : f32 to vector<32x1xf32>
    %10 = arith.divf %8, %9 : vector<32x1xf32>
    %11 = vector.broadcast %10 : vector<32x1xf32> to vector<32x32xf32>
    %12 = arith.subf %6, %11 : vector<32x32xf32>
    %13 = arith.mulf %12, %12 : vector<32x32xf32>
    %cst_2 = arith.constant dense<0.000000e+00> : vector<32xf32>
    %14 = vector.multi_reduction <add>, %13, %cst_2 [1] : vector<32x32xf32> to vector<32xf32>
    %15 = vector.shape_cast %14 : vector<32xf32> to vector<32x1xf32>
    %cst_3 = arith.constant 3.200000e+01 : f32
    %16 = vector.broadcast %cst_3 : f32 to vector<32x1xf32>
    %17 = arith.divf %15, %16 : vector<32x1xf32>
    %cst_4 = arith.constant 9.99999974E-6 : f32
    %18 = vector.broadcast %cst_4 : f32 to vector<32x1xf32>
    %19 = arith.addf %17, %18 : vector<32x1xf32>
    %20 = math.rsqrt %19 : vector<32x1xf32>
    %21 = vector.broadcast %20 : vector<32x1xf32> to vector<32x32xf32>
    %22 = arith.mulf %12, %21 : vector<32x32xf32>
    %c0_5 = arith.constant 0 : index
    %c0_6 = arith.constant 0 : index
    %23 = vector.load %arg2[%c0_5, %c0_6] : memref<1x32xf32, #tpu.memory_space<vmem>>, vector<1x32xf32>
    %24 = vector.broadcast %23 : vector<1x32xf32> to vector<32x32xf32>
    %25 = arith.mulf %22, %24 : vector<32x32xf32>
    %c0_7 = arith.constant 0 : index
    %c0_8 = arith.constant 0 : index
    %26 = vector.load %arg3[%c0_7, %c0_8] : memref<1x32xf32, #tpu.memory_space<vmem>>, vector<1x32xf32>
    %27 = vector.broadcast %26 : vector<1x32xf32> to vector<32x32xf32>
    %28 = arith.addf %25, %27 : vector<32x32xf32>
    %29 = arith.truncf %28 : vector<32x32xf32> to vector<32x32xbf16>
    %c0_9 = arith.constant 0 : index
    %c0_10 = arith.constant 0 : index
    %30 = vector.load %arg4[%c0_9, %c0_10] : memref<32x128xbf16, #tpu.memory_space<vmem>>, vector<32x128xbf16>
    %cst_11 = arith.constant dense<0.000000e+00> : vector<32x128xf32>
    %31 = tpu.matmul %29, %30, %cst_11 {dimension_numbers = #tpu.dot_dimension_numbers<[1], [0], [0], [1], [0, 0, 1, 1], [], []>} : vector<32x32xbf16>, vector<32x128xbf16>, vector<32x128xf32> -> vector<32x128xf32>
    %c0_12 = arith.constant 0 : index
    %c0_13 = arith.constant 0 : index
    %32 = vector.load %arg5[%c0_12, %c0_13] : memref<1x128xf32, #tpu.memory_space<vmem>>, vector<1x128xf32>
    %33 = vector.broadcast %32 : vector<1x128xf32> to vector<32x128xf32>
    %34 = arith.addf %31, %33 : vector<32x128xf32>
    %cst_14 = arith.constant 5.000000e-01 : f32
    %35 = vector.broadcast %cst_14 : f32 to vector<32x128xf32>
    %36 = arith.mulf %35, %34 : vector<32x128xf32>
    %cst_15 = arith.constant 0.707106769 : f32
    %37 = vector.broadcast %cst_15 : f32 to vector<32x128xf32>
    %38 = arith.mulf %34, %37 : vector<32x128xf32>
    %39 = math.erf %38 : vector<32x128xf32>
    %cst_16 = arith.constant 1.000000e+00 : f32
    %40 = vector.broadcast %cst_16 : f32 to vector<32x128xf32>
    %41 = arith.addf %40, %39 : vector<32x128xf32>
    %42 = arith.mulf %36, %41 : vector<32x128xf32>
    %43 = arith.truncf %42 : vector<32x128xf32> to vector<32x128xbf16>
    %c0_17 = arith.constant 0 : index
    %c0_18 = arith.constant 0 : index
    %44 = vector.load %arg6[%c0_17, %c0_18] : memref<128x32xbf16, #tpu.memory_space<vmem>>, vector<128x32xbf16>
    %cst_19 = arith.constant dense<0.000000e+00> : vector<32x32xf32>
    %45 = tpu.matmul %43, %44, %cst_19 {dimension_numbers = #tpu.dot_dimension_numbers<[1], [0], [0], [1], [0, 0, 1, 1], [], []>} : vector<32x128xbf16>, vector<128x32xbf16>, vector<32x32xf32> -> vector<32x32xf32>
    %c0_20 = arith.constant 0 : index
    %c0_21 = arith.constant 0 : index
    %46 = vector.load %arg7[%c0_20, %c0_21] : memref<1x32xf32, #tpu.memory_space<vmem>>, vector<1x32xf32>
    %47 = vector.broadcast %46 : vector<1x32xf32> to vector<32x32xf32>
    %48 = arith.addf %45, %47 : vector<32x32xf32>
    %49 = arith.addf %6, %48 : vector<32x32xf32>
    %50 = vector.extract_strided_slice %49 {offsets = [0, 0], sizes = [8, 32], strides = [1, 1]} : vector<32x32xf32> to vector<8x32xf32>
    %51 = vector.extract_strided_slice %49 {offsets = [8, 0], sizes = [8, 32], strides = [1, 1]} : vector<32x32xf32> to vector<8x32xf32>
    %52 = vector.extract_strided_slice %49 {offsets = [16, 0], sizes = [8, 32], strides = [1, 1]} : vector<32x32xf32> to vector<8x32xf32>
    %53 = vector.extract_strided_slice %49 {offsets = [24, 0], sizes = [8, 32], strides = [1, 1]} : vector<32x32xf32> to vector<8x32xf32>
    %54 = tpu.concatenate %50, %51, %52, %53 in 1 : vector<8x32xf32>, vector<8x32xf32>, vector<8x32xf32>, vector<8x32xf32> -> vector<8x128xf32>
    %55 = arith.truncf %54 : vector<8x128xf32> to vector<8x128xbf16>
    %c0_22 = arith.constant 0 : index
    %c0_23 = arith.constant 0 : index
    %56 = vector.load %arg8[%c0_22, %c0_23] : memref<128x128xbf16, #tpu.memory_space<vmem>>, vector<128x128xbf16>
    %cst_24 = arith.constant dense<0.000000e+00> : vector<8x128xf32>
    %57 = tpu.matmul %55, %56, %cst_24 {dimension_numbers = #tpu.dot_dimension_numbers<[1], [0], [0], [1], [0, 0, 1, 1], [], []>} : vector<8x128xbf16>, vector<128x128xbf16>, vector<8x128xf32> -> vector<8x128xf32>
    %c0_25 = arith.constant 0 : index
    %c0_26 = arith.constant 0 : index
    %58 = vector.load %arg9[%c0_25, %c0_26] : memref<1x128xf32, #tpu.memory_space<vmem>>, vector<1x128xf32>
    %59 = vector.broadcast %58 : vector<1x128xf32> to vector<8x128xf32>
    %60 = arith.addf %57, %59 : vector<8x128xf32>
    %c0_27 = arith.constant 0 : index
    %c0_28 = arith.constant 0 : index
    %61 = vector.load %arg10[%c0_27, %c0_28] : memref<8x128xf32, #tpu.memory_space<vmem>>, vector<8x128xf32>
    tpu.vector_store %arg10[%c0_27, %c0_28], %60 {strides = array<i32>} : memref<8x128xf32, #tpu.memory_space<vmem>>, vector<8x128xf32>,
    return
  }
  func.func @transform_0(%arg0: i32) -> (i32, i32) {
    %c0_i32 = arith.constant 0 : i32
    %c0_i32_0 = arith.constant 0 : i32
    return %arg0, %c0_i32 : i32, i32
  }
  func.func @transform_1(%arg0: i32) -> (i32, i32) {
    %c0_i32 = arith.constant 0 : i32
    %c0_i32_0 = arith.constant 0 : i32
    %c0_i32_1 = arith.constant 0 : i32
    return %c0_i32, %c0_i32_0 : i32, i32
  }
  func.func @transform_2(%arg0: i32) -> (i32, i32) {
    %c0_i32 = arith.constant 0 : i32
    %c0_i32_0 = arith.constant 0 : i32
    %c0_i32_1 = arith.constant 0 : i32
    return %c0_i32, %c0_i32_0 : i32, i32
  }
  func.func @transform_3(%arg0: i32) -> (i32, i32) {
    %c0_i32 = arith.constant 0 : i32
    %c0_i32_0 = arith.constant 0 : i32
    %c0_i32_1 = arith.constant 0 : i32
    return %c0_i32, %c0_i32_0 : i32, i32
  }
  func.func @transform_4(%arg0: i32) -> (i32, i32) {
    %c0_i32 = arith.constant 0 : i32
    %c0_i32_0 = arith.constant 0 : i32
    %c0_i32_1 = arith.constant 0 : i32
    return %c0_i32, %c0_i32_0 : i32, i32
  }
  func.func @transform_5(%arg0: i32) -> (i32, i32) {
    %c0_i32 = arith.constant 0 : i32
    %c0_i32_0 = arith.constant 0 : i32
    %c0_i32_1 = arith.constant 0 : i32
    return %c0_i32, %c0_i32_0 : i32, i32
  }
  func.func @transform_6(%arg0: i32) -> (i32, i32) {
    %c0_i32 = arith.constant 0 : i32
    %c0_i32_0 = arith.constant 0 : i32
    %c0_i32_1 = arith.constant 0 : i32
    return %c0_i32, %c0_i32_0 : i32, i32
  }
  func.func @transform_7(%arg0: i32) -> (i32, i32) {
    %c0_i32 = arith.constant 0 : i32
    %c0_i32_0 = arith.constant 0 : i32
    %c0_i32_1 = arith.constant 0 : i32
    return %c0_i32, %c0_i32_0 : i32, i32
  }
  func.func @transform_8(%arg0: i32) -> (i32, i32) {
    %c0_i32 = arith.constant 0 : i32
    %c0_i32_0 = arith.constant 0 : i32
    %c0_i32_1 = arith.constant 0 : i32
    return %c0_i32, %c0_i32_0 : i32, i32
  }
  func.func @transform_9(%arg0: i32) -> (i32, i32) {
    %c0_i32 = arith.constant 0 : i32
    %c0_i32_0 = arith.constant 0 : i32
    return %arg0, %c0_i32 : i32, i32
  }
}

</mosaic_0001>

<llo_original>
// kernel: classifier_forward.1
$region0: #{classifier_forward.1}
  #allocation0 [shape = 'u32[]', space=smem, size = 0x4, offset = 0x4, fixed_abs, tag = 'smem constant byte address 0x4 - core index']
  #allocation1 [shape = 'u32[144,128]{1,0:T(1,128)}', space=vmem, size = 0x12000, scoped, tag = 'internal scratch']
  %s0 = inlined_call_operand.vmem [shape: bf16[8,128], index: 0, kind: input, shape index: {}]
  %s1 = inlined_call_operand.vmem [shape: f32[1,32], index: 1, kind: input, shape index: {}]
  %s2 = inlined_call_operand.vmem [shape: f32[1,32], index: 2, kind: input, shape index: {}]
  %s3 = inlined_call_operand.vmem [shape: bf16[32,128], index: 3, kind: input, shape index: {}]
  %s4 = inlined_call_operand.vmem [shape: f32[1,128], index: 4, kind: input, shape index: {}]
  %s5 = inlined_call_operand.vmem [shape: bf16[128,32], index: 5, kind: input, shape index: {}]
  %s6 = inlined_call_operand.vmem [shape: f32[1,32], index: 6, kind: input, shape index: {}]
  %s7 = inlined_call_operand.vmem [shape: bf16[128,128], index: 7, kind: input, shape index: {}]
  %s8 = inlined_call_operand.vmem [shape: f32[1,128], index: 8, kind: input, shape index: {}]
  %s9 = inlined_call_operand.vmem [shape: f32[8,128], index: 9, kind: output, shape index: {}]
  %s10 = sld [smem:[#allocation0]]
  $region46: #{classifier_forward.1} parent=0
    _
  %s12 = ssub.s32 1, %s10
  %s13 = scalar_select 0, %s12, %s10
  // Predicated region
  $region2: #{classifier_forward.1} parent=0 // pred_check
    _
  $region3: #{classifier_forward.1} parent=0 // pred_check_branch
    %15 = sbr.rel (0) target = $region5
  $region4: #{classifier_forward.1} parent=0 // pred_region
    _
  $region5: #{classifier_forward.1} parent=0 // pred_fallthru
    _
  // Predicated region
  $region6: #{classifier_forward.1} parent=0 // pred_check
    _
  $region7: #{classifier_forward.1} parent=0 // pred_check_branch
    %17 = sbr.rel (0) target = $region9
  $region8: #{classifier_forward.1} parent=0 // pred_region
    _
  $region9: #{classifier_forward.1} parent=0 // pred_fallthru
    _
  // Predicated region
  $region10: #{classifier_forward.1} parent=0 // pred_check
    _
  $region11: #{classifier_forward.1} parent=0 // pred_check_branch
    %19 = sbr.rel (0) target = $region13
  $region12: #{classifier_forward.1} parent=0 // pred_region
    _
  $region13: #{classifier_forward.1} parent=0 // pred_fallthru
    _
  // Predicated region
  $region14: #{classifier_forward.1} parent=0 // pred_check
    _
  $region15: #{classifier_forward.1} parent=0 // pred_check_branch
    %21 = sbr.rel (0) target = $region17
  $region16: #{classifier_forward.1} parent=0 // pred_region
    _
  $region17: #{classifier_forward.1} parent=0 // pred_fallthru
    _
  // Predicated region
  $region18: #{classifier_forward.1} parent=0 // pred_check
    _
  $region19: #{classifier_forward.1} parent=0 // pred_check_branch
    %23 = sbr.rel (0) target = $region21
  $region20: #{classifier_forward.1} parent=0 // pred_region
    _
  $region21: #{classifier_forward.1} parent=0 // pred_fallthru
    _
  // Predicated region
  $region22: #{classifier_forward.1} parent=0 // pred_check
    _
  $region23: #{classifier_forward.1} parent=0 // pred_check_branch
    %25 = sbr.rel (0) target = $region25
  $region24: #{classifier_forward.1} parent=0 // pred_region
    _
  $region25: #{classifier_forward.1} parent=0 // pred_fallthru
    _
  // Predicated region
  $region26: #{classifier_forward.1} parent=0 // pred_check
    _
  $region27: #{classifier_forward.1} parent=0 // pred_check_branch
    %27 = sbr.rel (0) target = $region29
  $region28: #{classifier_forward.1} parent=0 // pred_region
    _
  $region29: #{classifier_forward.1} parent=0 // pred_fallthru
    _
  // Predicated region
  $region30: #{classifier_forward.1} parent=0 // pred_check
    _
  $region31: #{classifier_forward.1} parent=0 // pred_check_branch
    %29 = sbr.rel (0) target = $region33
  $region32: #{classifier_forward.1} parent=0 // pred_region
    _
  $region33: #{classifier_forward.1} parent=0 // pred_fallthru
    _
  // Predicated region
  $region34: #{classifier_forward.1} parent=0 // pred_check
    _
  $region35: #{classifier_forward.1} parent=0 // pred_check_branch
    %31 = sbr.rel (0) target = $region37
  $region36: #{classifier_forward.1} parent=0 // pred_region
    _
  $region37: #{classifier_forward.1} parent=0 // pred_fallthru
    _
  %v33 = vld [vmem:[%s0] sm:$0xf]
  %v34 = vunpack.c.l.bf16 %v33
  %36 = vrot.lane.b32.xlu0 %v34, 96
  %v37 = vpop.permute.xlu0 %36
  %39 = vrot.lane.b32.xlu0 %v34, 64
  %v40 = vpop.permute.xlu0 %39
  %42 = vrot.lane.b32.xlu0 %v34, 32
  %v43 = vpop.permute.xlu0 %42
  %vm45 = vcmask 261120
  %v46 = vsel %vm45, %v34, 0.0
  %47 = vadd.xlane.f32.xlu0 %v46
  %v48 = vpop.xlane.xlu0 %47
  %v49 = vsel %vm45, %v37, 0.0
  %50 = vadd.xlane.f32.xlu0 %v49
  %v51 = vpop.xlane.xlu0 %50
  %v52 = vsel %vm45, %v40, 0.0
  %53 = vadd.xlane.f32.xlu0 %v52
  %v54 = vpop.xlane.xlu0 %53
  %v55 = vsel %vm45, %v43, 0.0
  %56 = vadd.xlane.f32.xlu0 %v55
  %v57 = vpop.xlane.xlu0 %56
  %v58 = vrcp.pop 32.0
  %v59 = vmul.f32 %v48, %v58
  %v60 = vmul.f32 %v51, %v58
  %v61 = vmul.f32 %v54, %v58
  %v62 = vmul.f32 %v57, %v58
  %v63 = vsub.f32 %v34, %v59
  %v64 = vsub.f32 %v37, %v60
  %v65 = vsub.f32 %v40, %v61
  %v66 = vsub.f32 %v43, %v62
  %v67 = vmul.f32 %v63, %v63
  %v68 = vmul.f32 %v64, %v64
  %v69 = vmul.f32 %v65, %v65
  %v70 = vmul.f32 %v66, %v66
  %v71 = vsel %vm45, %v67, 0.0
  %72 = vadd.xlane.f32.xlu0 %v71
  %v73 = vpop.xlane.xlu0 %72
  %v74 = vsel %vm45, %v68, 0.0
  %75 = vadd.xlane.f32.xlu0 %v74
  %v76 = vpop.xlane.xlu0 %75
  %v77 = vsel %vm45, %v69, 0.0
  %78 = vadd.xlane.f32.xlu0 %v77
  %v79 = vpop.xlane.xlu0 %78
  %v80 = vsel %vm45, %v70, 0.0
  %81 = vadd.xlane.f32.xlu0 %v80
  %v82 = vpop.xlane.xlu0 %81
  %v83 = vmul.f32 %v73, %v58
  %v84 = vmul.f32 %v76, %v58
  %v85 = vmul.f32 %v79, %v58
  %v86 = vmul.f32 %v82, %v58
  %v87 = vadd.f32 %v83, 1e-05
  %v88 = vadd.f32 %v84, 1e-05
  %v89 = vadd.f32 %v85, 1e-05
  %v90 = vadd.f32 %v86, 1e-05
  %v91 = vrsqrt.pop %v87
  %v92 = vrsqrt.pop %v88
  %v93 = vrsqrt.pop %v89
  %v94 = vrsqrt.pop %v90
  %v95 = vmul.f32 %v63, %v91
  %v96 = vmul.f32 %v64, %v92
  %v97 = vmul.f32 %v65, %v93
  %v98 = vmul.f32 %v66, %v94
  %v99 = vld [vmem:[%s1] sm:$0x1]
  %v101 = vlaneseq
  %v102 = vshrl.u32 %v101, 7
  %v103 = vsub.s32 0, %v102
  %v104 = vrot.slane %v99, %v103
  %v106 = vmul.f32 %v95, %v104
  %v107 = vmul.f32 %v96, %v104
  %v108 = vmul.f32 %v97, %v104
  %v109 = vmul.f32 %v98, %v104
  %v110 = vld [vmem:[%s2] sm:$0x1]
  %v112 = vlaneseq
  %v113 = vshrl.u32 %v112, 7
  %v114 = vsub.s32 0, %v113
  %v115 = vrot.slane %v110, %v114
  %v117 = vadd.f32 %v106, %v115
  %v118 = vadd.f32 %v107, %v115
  %v119 = vadd.f32 %v108, %v115
  %v120 = vadd.f32 %v109, %v115
  %v121 = vpack.c.bf16 %v118, %v117
  %v122 = vpack.c.bf16 %v120, %v119
  %v123 = vld [vmem:[%s3] sm:$0xf]
  %v124 = vld [vmem:[%s3 + $0x4] sm:$0xf]
  %v125 = vld [vmem:[%s3 + $0x8] sm:$0xf]
  %v126 = vld [vmem:[%s3 + $0xc] sm:$0xf]
  %v127 = vld [vmem:[%s4] sm:$0x1]
  %v129 = vlaneseq
  %v130 = vshrl.u32 %v129, 7
  %v131 = vsub.s32 0, %v130
  %v132 = vrot.slane %v127, %v131
  %v138 = vunpack.c.l.b16 %v123
  %v139 = vunpack.c.l.b16 %v124
  %v140 = vunpack.c.l.b16 %v125
  %v141 = vunpack.c.l.b16 %v126
  %v142 = vpack.c.b16 %v139, %v138
  %v143 = vpack.c.b16 %v141, %v140
  %v147 = vsel %vm45, %v121, 0
  %v150 = vsel %vm45, %v122, 0
  %152 = vmatprep.subr.bf16.mxu0 0
  %153 = vmatpush1.bf16.msra.mxu0 %v142
  %154 = vmatprep.subr.bf16.mxu0 0
  %155 = vmatpush1.bf16.msra.mxu0 %v143
  %156 = vmatprep.subr.bf16.mxu0 0
  %157 = vmatpush1.bf16.msra.mxu0 0
  %158 = vmatprep.subr.bf16.mxu0 0
  %159 = vmatpush1.bf16.msra.mxu0 0
  %160 = vmatprep.subr.bf16.mxu0 0
  %161 = vmatpush1.bf16.msra.mxu0 0
  %162 = vmatprep.subr.bf16.mxu0 0
  %163 = vmatpush1.bf16.msra.mxu0 0
  %164 = vmatprep.subr.bf16.mxu0 0
  %165 = vmatpush1.bf16.msra.mxu0 0
  %166 = vmatprep.subr.bf16.mxu0 0
  %167 = vmatpush1.bf16.msra.mxu0 0
  %168 = vmatprep.subr.bf16.mxu0 0
  %169 = vmatpush1.bf16.msra.mxu0 0
  %170 = vmatprep.subr.bf16.mxu0 0
  %171 = vmatpush1.bf16.msra.mxu0 0
  %172 = vmatprep.subr.bf16.mxu0 0
  %173 = vmatpush1.bf16.msra.mxu0 0
  %174 = vmatprep.subr.bf16.mxu0 0
  %175 = vmatpush1.bf16.msra.mxu0 0
  %176 = vmatprep.subr.bf16.mxu0 0
  %177 = vmatpush1.bf16.msra.mxu0 0
  %178 = vmatprep.subr.bf16.mxu0 0
  %179 = vmatpush1.bf16.msra.mxu0 0
  %180 = vmatprep.subr.bf16.mxu0 0
  %181 = vmatpush1.bf16.msra.mxu0 0
  %182 = vmatprep.subr.bf16.mxu0 0
  %183 = vmatpush1.bf16.msra.mxu0 0
  %184 = vmatprep.mubr.bf16.mxu0 0
  %185 = vmatmul.mubr.bf16.gmra.mrb[0].mxu0 %v147
  %v186 = vpop.f32.mrb[0].mxu0
  %v187 = vadd.f32 %v132, %v186
  %v188 = vpop.f32.mrb[0].mxu0
  %v189 = vpop.f32.mrb[0].mxu0
  %v190 = vadd.f32 %v132, %v189
  %v191 = vpop.f32.mrb[0].mxu0
  %192 = vmatprep.mubr.bf16.mxu0 0
  %193 = vmatmul.mubr.bf16.gmra.mrb[0].mxu0 %v150
  %v194 = vpop.f32.mrb[0].mxu0
  %v195 = vadd.f32 %v132, %v194
  %v196 = vpop.f32.mrb[0].mxu0
  %v197 = vpop.f32.mrb[0].mxu0
  %v198 = vadd.f32 %v132, %v197
  %v199 = vpop.f32.mrb[0].mxu0
  %200 = vdwg.mxu0
  %v201 = vmul.f32 %v187, 0.5
  %v202 = vmul.f32 %v190, 0.5
  %v203 = vmul.f32 %v195, 0.5
  %v204 = vmul.f32 %v198, 0.5
  %v205 = vmul.f32 %v187, 0.70710677
  %v206 = vmul.f32 %v190, 0.70710677
  %v207 = vmul.f32 %v195, 0.70710677
  %v208 = vmul.f32 %v198, 0.70710677
  %v209 = verf.f32.pop %v205
  %v210 = verf.f32.pop %v206
  %v211 = verf.f32.pop %v207
  %v212 = verf.f32.pop %v208
  %v213 = vadd.f32 %v209, 1.0
  %v214 = vadd.f32 %v210, 1.0
  %v215 = vadd.f32 %v211, 1.0
  %v216 = vadd.f32 %v212, 1.0
  %v217 = vmul.f32 %v201, %v213
  %v218 = vmul.f32 %v202, %v214
  %v219 = vmul.f32 %v203, %v215
  %v220 = vmul.f32 %v204, %v216
  %v221 = vpack.c.bf16 %v218, %v217
  %v222 = vpack.c.bf16 %v220, %v219
  %v223 = vld [vmem:[%s5] sm:$0xf]
  %v224 = vld [vmem:[%s5 + $0x4] sm:$0xf]
  %v225 = vld [vmem:[%s5 + $0x8] sm:$0xf]
  %v226 = vld [vmem:[%s5 + $0xc] sm:$0xf]
  %v227 = vld [vmem:[%s5 + $0x10] sm:$0xf]
  %v228 = vld [vmem:[%s5 + $0x14] sm:$0xf]
  %v229 = vld [vmem:[%s5 + $0x18] sm:$0xf]
  %v230 = vld [vmem:[%s5 + $0x1c] sm:$0xf]
  %v231 = vld [vmem:[%s5 + $0x20] sm:$0xf]
  %v232 = vld [vmem:[%s5 + $0x24] sm:$0xf]
  %v233 = vld [vmem:[%s5 + $0x28] sm:$0xf]
  %v234 = vld [vmem:[%s5 + $0x2c] sm:$0xf]
  %v235 = vld [vmem:[%s5 + $0x30] sm:$0xf]
  %v236 = vld [vmem:[%s5 + $0x34] sm:$0xf]
  %v237 = vld [vmem:[%s5 + $0x38] sm:$0xf]
  %v238 = vld [vmem:[%s5 + $0x3c] sm:$0xf]
  %v239 = vld [vmem:[%s6] sm:$0x1]
  %v241 = vlaneseq
  %v242 = vshrl.u32 %v241, 7
  %v243 = vsub.s32 0, %v242
  %v244 = vrot.slane %v239, %v243
  %v262 = vunpack.c.l.b16 %v223
  %v263 = vunpack.c.l.b16 %v224
  %v264 = vunpack.c.l.b16 %v225
  %v265 = vunpack.c.l.b16 %v226
  %v266 = vunpack.c.l.b16 %v227
  %v267 = vunpack.c.l.b16 %v228
  %v268 = vunpack.c.l.b16 %v229
  %v269 = vunpack.c.l.b16 %v230
  %v270 = vunpack.c.l.b16 %v231
  %v271 = vunpack.c.l.b16 %v232
  %v272 = vunpack.c.l.b16 %v233
  %v273 = vunpack.c.l.b16 %v234
  %v274 = vunpack.c.l.b16 %v235
  %v275 = vunpack.c.l.b16 %v236
  %v276 = vunpack.c.l.b16 %v237
  %v277 = vunpack.c.l.b16 %v238
  %v278 = vpack.c.b16 %v263, %v262
  %v279 = vpack.c.b16 %v265, %v264
  %v280 = vpack.c.b16 %v267, %v266
  %v281 = vpack.c.b16 %v269, %v268
  %v282 = vpack.c.b16 %v271, %v270
  %v283 = vpack.c.b16 %v273, %v272
  %v284 = vpack.c.b16 %v275, %v274
  %v285 = vpack.c.b16 %v277, %v276
  %294 = vmatprep.subr.bf16.mxu0 0
  %295 = vmatpush1.bf16.msra.mxu0 %v278
  %296 = vmatprep.subr.bf16.mxu0 0
  %297 = vmatpush1.bf16.msra.mxu0 %v279
  %298 = vmatprep.subr.bf16.mxu0 0
  %299 = vmatpush1.bf16.msra.mxu0 %v280
  %300 = vmatprep.subr.bf16.mxu0 0
  %301 = vmatpush1.bf16.msra.mxu0 %v281
  %302 = vmatprep.subr.bf16.mxu0 0
  %303 = vmatpush1.bf16.msra.mxu0 %v282
  %304 = vmatprep.subr.bf16.mxu0 0
  %305 = vmatpush1.bf16.msra.mxu0 %v283
  %306 = vmatprep.subr.bf16.mxu0 0
  %307 = vmatpush1.bf16.msra.mxu0 %v284
  %308 = vmatprep.subr.bf16.mxu0 0
  %309 = vmatpush1.bf16.msra.mxu0 %v285
  %310 = vmatprep.subr.bf16.mxu0 0
  %311 = vmatpush1.bf16.msra.mxu0 0
  %312 = vmatprep.subr.bf16.mxu0 0
  %313 = vmatpush1.bf16.msra.mxu0 0
  %314 = vmatprep.subr.bf16.mxu0 0
  %315 = vmatpush1.bf16.msra.mxu0 0
  %316 = vmatprep.subr.bf16.mxu0 0
  %317 = vmatpush1.bf16.msra.mxu0 0
  %318 = vmatprep.subr.bf16.mxu0 0
  %319 = vmatpush1.bf16.msra.mxu0 0
  %320 = vmatprep.subr.bf16.mxu0 0
  %321 = vmatpush1.bf16.msra.mxu0 0
  %322 = vmatprep.subr.bf16.mxu0 0
  %323 = vmatpush1.bf16.msra.mxu0 0
  %324 = vmatprep.subr.bf16.mxu0 0
  %325 = vmatpush1.bf16.msra.mxu0 0
  %326 = vmatprep.mubr.bf16.mxu0 0
  %327 = vmatmul.mubr.bf16.gmra.mrb[0].mxu0 %v221
  %v328 = vpop.f32.mrb[0].mxu0
  %v329 = vadd.f32 %v244, %v328
  %v330 = vpop.f32.mrb[0].mxu0
  %v331 = vpop.f32.mrb[0].mxu0
  %v332 = vadd.f32 %v244, %v331
  %v333 = vpop.f32.mrb[0].mxu0
  %334 = vmatprep.mubr.bf16.mxu0 0
  %335 = vmatmul.mubr.bf16.gmra.mrb[0].mxu0 %v222
  %v336 = vpop.f32.mrb[0].mxu0
  %v337 = vadd.f32 %v244, %v336
  %v338 = vpop.f32.mrb[0].mxu0
  %v339 = vpop.f32.mrb[0].mxu0
  %v340 = vadd.f32 %v244, %v339
  %v341 = vpop.f32.mrb[0].mxu0
  %342 = vdwg.mxu0
  %v343 = vadd.f32 %v34, %v329
  %v344 = vadd.f32 %v37, %v332
  %v345 = vadd.f32 %v40, %v337
  %v346 = vadd.f32 %v43, %v340
  %348 = vrot.lane.b32.xlu0 %v344, 32
  %v349 = vpop.permute.xlu0 %348
  %352 = vrot.lane.b32.xlu0 %v345, 64
  %v353 = vpop.permute.xlu0 %352
  %356 = vrot.lane.b32.xlu0 %v346, 96
  %v357 = vpop.permute.xlu0 %356
  %v359 = vsel %vm45, %v343, %v349
  %vm360 = vcmask 523264
  %v361 = vsel %vm360, %v359, %v353
  %vm362 = vcmask 785408
  %v363 = vsel %vm362, %v361, %v357
  %v364 = vpack.c.bf16 %v363, %v363
  %v365 = vld [vmem:[%s7] sm:$0xf]
  %v366 = vld [vmem:[%s7 + $0x4] sm:$0xf]
  %v367 = vld [vmem:[%s7 + $0x8] sm:$0xf]
  %v368 = vld [vmem:[%s7 + $0xc] sm:$0xf]
  %v369 = vld [vmem:[%s7 + $0x10] sm:$0xf]
  %v370 = vld [vmem:[%s7 + $0x14] sm:$0xf]
  %v371 = vld [vmem:[%s7 + $0x18] sm:$0xf]
  %v372 = vld [vmem:[%s7 + $0x1c] sm:$0xf]
  %v373 = vld [vmem:[%s7 + $0x20] sm:$0xf]
  %v374 = vld [vmem:[%s7 + $0x24] sm:$0xf]
  %v375 = vld [vmem:[%s7 + $0x28] sm:$0xf]
  %v376 = vld [vmem:[%s7 + $0x2c] sm:$0xf]
  %v377 = vld [vmem:[%s7 + $0x30] sm:$0xf]
  %v378 = vld [vmem:[%s7 + $0x34] sm:$0xf]
  %v379 = vld [vmem:[%s7 + $0x38] sm:$0xf]
  %v380 = vld [vmem:[%s7 + $0x3c] sm:$0xf]
  %v381 = vld [vmem:[%s8] sm:$0x1]
  %v383 = vlaneseq
  %v384 = vshrl.u32 %v383, 7
  %v385 = vsub.s32 0, %v384
  %v386 = vrot.slane %v381, %v385
  %v404 = vunpack.c.l.b16 %v365
  %v405 = vunpack.c.l.b16 %v366
  %v406 = vunpack.c.l.b16 %v367
  %v407 = vunpack.c.l.b16 %v368
  %v408 = vunpack.c.l.b16 %v369
  %v409 = vunpack.c.l.b16 %v370
  %v410 = vunpack.c.l.b16 %v371
  %v411 = vunpack.c.l.b16 %v372
  %v412 = vunpack.c.l.b16 %v373
  %v413 = vunpack.c.l.b16 %v374
  %v414 = vunpack.c.l.b16 %v375
  %v415 = vunpack.c.l.b16 %v376
  %v416 = vunpack.c.l.b16 %v377
  %v417 = vunpack.c.l.b16 %v378
  %v418 = vunpack.c.l.b16 %v379
  %v419 = vunpack.c.l.b16 %v380
  %v420 = vpack.c.b16 %v405, %v404
  %v421 = vpack.c.b16 %v407, %v406
  %v422 = vpack.c.b16 %v409, %v408
  %v423 = vpack.c.b16 %v411, %v410
  %v424 = vpack.c.b16 %v413, %v412
  %v425 = vpack.c.b16 %v415, %v414
  %v426 = vpack.c.b16 %v417, %v416
  %v427 = vpack.c.b16 %v419, %v418
  %436 = vmatprep.subr.bf16.mxu0 0
  %437 = vmatpush1.bf16.msra.mxu0 %v420
  %438 = vmatprep.subr.bf16.mxu0 0
  %439 = vmatpush1.bf16.msra.mxu0 %v421
  %440 = vmatprep.subr.bf16.mxu0 0
  %441 = vmatpush1.bf16.msra.mxu0 %v422
  %442 = vmatprep.subr.bf16.mxu0 0
  %443 = vmatpush1.bf16.msra.mxu0 %v423
  %444 = vmatprep.subr.bf16.mxu0 0
  %445 = vmatpush1.bf16.msra.mxu0 %v424
  %446 = vmatprep.subr.bf16.mxu0 0
  %447 = vmatpush1.bf16.msra.mxu0 %v425
  %448 = vmatprep.subr.bf16.mxu0 0
  %449 = vmatpush1.bf16.msra.mxu0 %v426
  %450 = vmatprep.subr.bf16.mxu0 0
  %451 = vmatpush1.bf16.msra.mxu0 %v427
  %452 = vmatprep.subr.bf16.mxu0 0
  %453 = vmatpush1.bf16.msra.mxu0 0
  %454 = vmatprep.subr.bf16.mxu0 0
  %455 = vmatpush1.bf16.msra.mxu0 0
  %456 = vmatprep.subr.bf16.mxu0 0
  %457 = vmatpush1.bf16.msra.mxu0 0
  %458 = vmatprep.subr.bf16.mxu0 0
  %459 = vmatpush1.bf16.msra.mxu0 0
  %460 = vmatprep.subr.bf16.mxu0 0
  %461 = vmatpush1.bf16.msra.mxu0 0
  %462 = vmatprep.subr.bf16.mxu0 0
  %463 = vmatpush1.bf16.msra.mxu0 0
  %464 = vmatprep.subr.bf16.mxu0 0
  %465 = vmatpush1.bf16.msra.mxu0 0
  %466 = vmatprep.subr.bf16.mxu0 0
  %467 = vmatpush1.bf16.msra.mxu0 0
  %468 = vmatprep.mubr.bf16.mxu0 0
  %469 = vmatmul.mubr.bf16.gmra.mrb[0].mxu0 %v364
  %v470 = vpop.f32.mrb[0].mxu0
  %v471 = vadd.f32 %v386, %v470
  %v472 = vpop.f32.mrb[0].mxu0
  %v473 = vpop.f32.mrb[0].mxu0
  %v474 = vpop.f32.mrb[0].mxu0
  %475 = vdwg.mxu0
  %476 = vst [vmem:[%s9] sm:$0xff] %v471
  // Predicated region
  $region38: #{classifier_forward.1} parent=0 // pred_check
    _
  $region39: #{classifier_forward.1} parent=0 // pred_check_branch
    %478 = sbr.rel (0) target = $region41
  $region40: #{classifier_forward.1} parent=0 // pred_region
    _
  $region41: #{classifier_forward.1} parent=0 // pred_fallthru
    _
  // Predicated region
  $region42: #{classifier_forward.1} parent=0 // pred_check
    _
  $region43: #{classifier_forward.1} parent=0 // pred_check_branch
    %480 = sbr.rel (0) target = $region45
  $region44: #{classifier_forward.1} parent=0 // pred_region
    _
  $region45: #{classifier_forward.1} parent=0 // pred_fallthru
    _

// kernel: classifier_forward.1
$region0: #{classifier_forward.1}
  #allocation0 [shape = 'u32[]', space=smem, size = 0x4, offset = 0x4, fixed_abs, tag = 'smem constant byte address 0x4 - core index']
  #allocation1 [shape = 'u32[144,128]{1,0:T(1,128)}', space=vmem, size = 0x12000, scoped, tag = 'internal scratch']
  %s0 = inlined_call_operand.vmem [shape: bf16[8,128], index: 0, kind: input, shape index: {}]
  %s1 = inlined_call_operand.vmem [shape: f32[1,32], index: 1, kind: input, shape index: {}]
  %s2 = inlined_call_operand.vmem [shape: f32[1,32], index: 2, kind: input, shape index: {}]
  %s3 = inlined_call_operand.vmem [shape: bf16[32,128], index: 3, kind: input, shape index: {}]
  %s4 = inlined_call_operand.vmem [shape: f32[1,128], index: 4, kind: input, shape index: {}]
  %s5 = inlined_call_operand.vmem [shape: bf16[128,32], index: 5, kind: input, shape index: {}]
  %s6 = inlined_call_operand.vmem [shape: f32[1,32], index: 6, kind: input, shape index: {}]
  %s7 = inlined_call_operand.vmem [shape: bf16[128,128], index: 7, kind: input, shape index: {}]
  %s8 = inlined_call_operand.vmem [shape: f32[1,128], index: 8, kind: input, shape index: {}]
  %s9 = inlined_call_operand.vmem [shape: f32[8,128], index: 9, kind: output, shape index: {}]
  %s10 = sld [smem:[#allocation0]]
  $region46: #{classifier_forward.1} parent=0
    _
  %s12 = ssub.s32 1, %s10
  %s13 = scalar_select 0, %s12, %s10
  // Predicated region
  $region2: #{classifier_forward.1} parent=0 // pred_check
    _
  $region3: #{classifier_forward.1} parent=0 // pred_check_branch
    %15 = sbr.rel (0) target = $region5
  $region4: #{classifier_forward.1} parent=0 // pred_region
    _
  $region5: #{classifier_forward.1} parent=0 // pred_fallthru
    _
  // Predicated region
  $region6: #{classifier_forward.1} parent=0 // pred_check
    _
  $region7: #{classifier_forward.1} parent=0 // pred_check_branch
    %17 = sbr.rel (0) target = $region9
  $region8: #{classifier_forward.1} parent=0 // pred_region
    _
  $region9: #{classifier_forward.1} parent=0 // pred_fallthru
    _
  // Predicated region
  $region10: #{classifier_forward.1} parent=0 // pred_check
    _
  $region11: #{classifier_forward.1} parent=0 // pred_check_branch
    %19 = sbr.rel (0) target = $region13
  $region12: #{classifier_forward.1} parent=0 // pred_region
    _
  $region13: #{classifier_forward.1} parent=0 // pred_fallthru
    _
  // Predicated region
  $region14: #{classifier_forward.1} parent=0 // pred_check
    _
  $region15: #{classifier_forward.1} parent=0 // pred_check_branch
    %21 = sbr.rel (0) target = $region17
  $region16: #{classifier_forward.1} parent=0 // pred_region
    _
  $region17: #{classifier_forward.1} parent=0 // pred_fallthru
    _
  // Predicated region
  $region18: #{classifier_forward.1} parent=0 // pred_check
    _
  $region19: #{classifier_forward.1} parent=0 // pred_check_branch
    %23 = sbr.rel (0) target = $region21
  $region20: #{classifier_forward.1} parent=0 // pred_region
    _
  $region21: #{classifier_forward.1} parent=0 // pred_fallthru
    _
  // Predicated region
  $region22: #{classifier_forward.1} parent=0 // pred_check
    _
  $region23: #{classifier_forward.1} parent=0 // pred_check_branch
    %25 = sbr.rel (0) target = $region25
  $region24: #{classifier_forward.1} parent=0 // pred_region
    _
  $region25: #{classifier_forward.1} parent=0 // pred_fallthru
    _
  // Predicated region
  $region26: #{classifier_forward.1} parent=0 // pred_check
    _
  $region27: #{classifier_forward.1} parent=0 // pred_check_branch
    %27 = sbr.rel (0) target = $region29
  $region28: #{classifier_forward.1} parent=0 // pred_region
    _
  $region29: #{classifier_forward.1} parent=0 // pred_fallthru
    _
  // Predicated region
  $region30: #{classifier_forward.1} parent=0 // pred_check
    _
  $region31: #{classifier_forward.1} parent=0 // pred_check_branch
    %29 = sbr.rel (0) target = $region33
  $region32: #{classifier_forward.1} parent=0 // pred_region
    _
  $region33: #{classifier_forward.1} parent=0 // pred_fallthru
    _
  // Predicated region
  $region34: #{classifier_forward.1} parent=0 // pred_check
    _
  $region35: #{classifier_forward.1} parent=0 // pred_check_branch
    %31 = sbr.rel (0) target = $region37
  $region36: #{classifier_forward.1} parent=0 // pred_region
    _
  $region37: #{classifier_forward.1} parent=0 // pred_fallthru
    _
  %v33 = vld [vmem:[%s0] sm:$0xf]
  %v34 = vunpack.c.l.bf16 %v33
  %36 = vrot.lane.b32.xlu0 %v34, 96
  %v37 = vpop.permute.xlu0 %36
  %39 = vrot.lane.b32.xlu0 %v34, 64
  %v40 = vpop.permute.xlu0 %39
  %42 = vrot.lane.b32.xlu0 %v34, 32
  %v43 = vpop.permute.xlu0 %42
  %vm45 = vcmask 261120
  %v46 = vsel %vm45, %v34, 0.0
  %47 = vadd.xlane.f32.xlu0 %v46
  %v48 = vpop.xlane.xlu0 %47
  %v49 = vsel %vm45, %v37, 0.0
  %50 = vadd.xlane.f32.xlu0 %v49
  %v51 = vpop.xlane.xlu0 %50
  %v52 = vsel %vm45, %v40, 0.0
  %53 = vadd.xlane.f32.xlu0 %v52
  %v54 = vpop.xlane.xlu0 %53
  %v55 = vsel %vm45, %v43, 0.0
  %56 = vadd.xlane.f32.xlu0 %v55
  %v57 = vpop.xlane.xlu0 %56
  %v58 = vrcp.pop 32.0
  %v59 = vmul.f32 %v48, %v58
  %v60 = vmul.f32 %v51, %v58
  %v61 = vmul.f32 %v54, %v58
  %v62 = vmul.f32 %v57, %v58
  %v63 = vsub.f32 %v34, %v59
  %v64 = vsub.f32 %v37, %v60
  %v65 = vsub.f32 %v40, %v61
  %v66 = vsub.f32 %v43, %v62
  %v67 = vmul.f32 %v63, %v63
  %v68 = vmul.f32 %v64, %v64
  %v69 = vmul.f32 %v65, %v65
  %v70 = vmul.f32 %v66, %v66
  %v71 = vsel %vm45, %v67, 0.0
  %72 = vadd.xlane.f32.xlu0 %v71
  %v73 = vpop.xlane.xlu0 %72
  %v74 = vsel %vm45, %v68, 0.0
  %75 = vadd.xlane.f32.xlu0 %v74
  %v76 = vpop.xlane.xlu0 %75
  %v77 = vsel %vm45, %v69, 0.0
  %78 = vadd.xlane.f32.xlu0 %v77
  %v79 = vpop.xlane.xlu0 %78
  %v80 = vsel %vm45, %v70, 0.0
  %81 = vadd.xlane.f32.xlu0 %v80
  %v82 = vpop.xlane.xlu0 %81
  %v83 = vmul.f32 %v73, %v58
  %v84 = vmul.f32 %v76, %v58
  %v85 = vmul.f32 %v79, %v58
  %v86 = vmul.f32 %v82, %v58
  %v87 = vadd.f32 %v83, 1e-05
  %v88 = vadd.f32 %v84, 1e-05
  %v89 = vadd.f32 %v85, 1e-05
  %v90 = vadd.f32 %v86, 1e-05
  %v91 = vrsqrt.pop %v87
  %v92 = vrsqrt.pop %v88
  %v93 = vrsqrt.pop %v89
  %v94 = vrsqrt.pop %v90
  %v95 = vmul.f32 %v63, %v91
  %v96 = vmul.f32 %v64, %v92
  %v97 = vmul.f32 %v65, %v93
  %v98 = vmul.f32 %v66, %v94
  %v99 = vld [vmem:[%s1] sm:$0x1]
  %v101 = vlaneseq
  %v102 = vshrl.u32 %v101, 7
  %v103 = vsub.s32 0, %v102
  %v104 = vrot.slane %v99, %v103
  %v106 = vmul.f32 %v95, %v104
  %v107 = vmul.f32 %v96, %v104
  %v108 = vmul.f32 %v97, %v104
  %v109 = vmul.f32 %v98, %v104
  %v110 = vld [vmem:[%s2] sm:$0x1]
  %v112 = vlaneseq
  %v113 = vshrl.u32 %v112, 7
  %v114 = vsub.s32 0, %v113
  %v115 = vrot.slane %v110, %v114
  %v117 = vadd.f32 %v106, %v115
  %v118 = vadd.f32 %v107, %v115
  %v119 = vadd.f32 %v108, %v115
  %v120 = vadd.f32 %v109, %v115
  %v121 = vpack.c.bf16 %v118, %v117
  %v122 = vpack.c.bf16 %v120, %v119
  %v123 = vld [vmem:[%s3] sm:$0xf]
  %v124 = vld [vmem:[%s3 + $0x4] sm:$0xf]
  %v125 = vld [vmem:[%s3 + $0x8] sm:$0xf]
  %v126 = vld [vmem:[%s3 + $0xc] sm:$0xf]
  %v127 = vld [vmem:[%s4] sm:$0x1]
  %v129 = vlaneseq
  %v130 = vshrl.u32 %v129, 7
  %v131 = vsub.s32 0, %v130
  %v132 = vrot.slane %v127, %v131
  %v138 = vunpack.c.l.b16 %v123
  %v139 = vunpack.c.l.b16 %v124
  %v140 = vunpack.c.l.b16 %v125
  %v141 = vunpack.c.l.b16 %v126
  %v142 = vpack.c.b16 %v139, %v138
  %v143 = vpack.c.b16 %v141, %v140
  %v147 = vsel %vm45, %v121, 0
  %v150 = vsel %vm45, %v122, 0
  %152 = vmatprep.subr.bf16.mxu0 0
  %153 = vmatpush1.bf16.msra.mxu0 %v142
  %154 = vmatprep.subr.bf16.mxu0 0
  %155 = vmatpush1.bf16.msra.mxu0 %v143
  %156 = vmatprep.subr.bf16.mxu0 0
  %157 = vmatpush1.bf16.msra.mxu0 0
  %158 = vmatprep.subr.bf16.mxu0 0
  %159 = vmatpush1.bf16.msra.mxu0 0
  %160 = vmatprep.subr.bf16.mxu0 0
  %161 = vmatpush1.bf16.msra.mxu0 0
  %162 = vmatprep.subr.bf16.mxu0 0
  %163 = vmatpush1.bf16.msra.mxu0 0
  %164 = vmatprep.subr.bf16.mxu0 0
  %165 = vmatpush1.bf16.msra.mxu0 0
  %166 = vmatprep.subr.bf16.mxu0 0
  %167 = vmatpush1.bf16.msra.mxu0 0
  %168 = vmatprep.subr.bf16.mxu0 0
  %169 = vmatpush1.bf16.msra.mxu0 0
  %170 = vmatprep.subr.bf16.mxu0 0
  %171 = vmatpush1.bf16.msra.mxu0 0
  %172 = vmatprep.subr.bf16.mxu0 0
  %173 = vmatpush1.bf16.msra.mxu0 0
  %174 = vmatprep.subr.bf16.mxu0 0
  %175 = vmatpush1.bf16.msra.mxu0 0
  %176 = vmatprep.subr.bf16.mxu0 0
  %177 = vmatpush1.bf16.msra.mxu0 0
  %178 = vmatprep.subr.bf16.mxu0 0
  %179 = vmatpush1.bf16.msra.mxu0 0
  %180 = vmatprep.subr.bf16.mxu0 0
  %181 = vmatpush1.bf16.msra.mxu0 0
  %182 = vmatprep.subr.bf16.mxu0 0
  %183 = vmatpush1.bf16.msra.mxu0 0
  %184 = vmatprep.mubr.bf16.mxu0 0
  %185 = vmatmul.mubr.bf16.gmra.mrb[0].mxu0 %v147
  %v186 = vpop.f32.mrb[0].mxu0
  %v187 = vadd.f32 %v132, %v186
  %v188 = vpop.f32.mrb[0].mxu0
  %v189 = vpop.f32.mrb[0].mxu0
  %v190 = vadd.f32 %v132, %v189
  %v191 = vpop.f32.mrb[0].mxu0
  %192 = vmatprep.mubr.bf16.mxu0 0
  %193 = vmatmul.mubr.bf16.gmra.mrb[0].mxu0 %v150
  %v194 = vpop.f32.mrb[0].mxu0
  %v195 = vadd.f32 %v132, %v194
  %v196 = vpop.f32.mrb[0].mxu0
  %v197 = vpop.f32.mrb[0].mxu0
  %v198 = vadd.f32 %v132, %v197
  %v199 = vpop.f32.mrb[0].mxu0
  %200 = vdwg.mxu0
  %v201 = vmul.f32 %v187, 0.5
  %v202 = vmul.f32 %v190, 0.5
  %v203 = vmul.f32 %v195, 0.5
  %v204 = vmul.f32 %v198, 0.5
  %v205 = vmul.f32 %v187, 0.70710677
  %v206 = vmul.f32 %v190, 0.70710677
  %v207 = vmul.f32 %v195, 0.70710677
  %v208 = vmul.f32 %v198, 0.70710677
  %v209 = verf.f32.pop %v205
  %v210 = verf.f32.pop %v206
  %v211 = verf.f32.pop %v207
  %v212 = verf.f32.pop %v208
  %v213 = vadd.f32 %v209, 1.0
  %v214 = vadd.f32 %v210, 1.0
  %v215 = vadd.f32 %v211, 1.0
  %v216 = vadd.f32 %v212, 1.0
  %v217 = vmul.f32 %v201, %v213
  %v218 = vmul.f32 %v202, %v214
  %v219 = vmul.f32 %v203, %v215
  %v220 = vmul.f32 %v204, %v216
  %v221 = vpack.c.bf16 %v218, %v217
  %v222 = vpack.c.bf16 %v220, %v219
  %v223 = vld [vmem:[%s5] sm:$0xf]
  %v224 = vld [vmem:[%s5 + $0x4] sm:$0xf]
  %v225 = vld [vmem:[%s5 + $0x8] sm:$0xf]
  %v226 = vld [vmem:[%s5 + $0xc] sm:$0xf]
  %v227 = vld [vmem:[%s5 + $0x10] sm:$0xf]
  %v228 = vld [vmem:[%s5 + $0x14] sm:$0xf]
  %v229 = vld [vmem:[%s5 + $0x18] sm:$0xf]
  %v230 = vld [vmem:[%s5 + $0x1c] sm:$0xf]
  %v231 = vld [vmem:[%s5 + $0x20] sm:$0xf]
  %v232 = vld [vmem:[%s5 + $0x24] sm:$0xf]
  %v233 = vld [vmem:[%s5 + $0x28] sm:$0xf]
  %v234 = vld [vmem:[%s5 + $0x2c] sm:$0xf]
  %v235 = vld [vmem:[%s5 + $0x30] sm:$0xf]
  %v236 = vld [vmem:[%s5 + $0x34] sm:$0xf]
  %v237 = vld [vmem:[%s5 + $0x38] sm:$0xf]
  %v238 = vld [vmem:[%s5 + $0x3c] sm:$0xf]
  %v239 = vld [vmem:[%s6] sm:$0x1]
  %v241 = vlaneseq
  %v242 = vshrl.u32 %v241, 7
  %v243 = vsub.s32 0, %v242
  %v244 = vrot.slane %v239, %v243
  %v262 = vunpack.c.l.b16 %v223
  %v263 = vunpack.c.l.b16 %v224
  %v264 = vunpack.c.l.b16 %v225
  %v265 = vunpack.c.l.b16 %v226
  %v266 = vunpack.c.l.b16 %v227
  %v267 = vunpack.c.l.b16 %v228
  %v268 = vunpack.c.l.b16 %v229
  %v269 = vunpack.c.l.b16 %v230
  %v270 = vunpack.c.l.b16 %v231
  %v271 = vunpack.c.l.b16 %v232
  %v272 = vunpack.c.l.b16 %v233
  %v273 = vunpack.c.l.b16 %v234
  %v274 = vunpack.c.l.b16 %v235
  %v275 = vunpack.c.l.b16 %v236
  %v276 = vunpack.c.l.b16 %v237
  %v277 = vunpack.c.l.b16 %v238
  %v278 = vpack.c.b16 %v263, %v262
  %v279 = vpack.c.b16 %v265, %v264
  %v280 = vpack.c.b16 %v267, %v266
  %v281 = vpack.c.b16 %v269, %v268
  %v282 = vpack.c.b16 %v271, %v270
  %v283 = vpack.c.b16 %v273, %v272
  %v284 = vpack.c.b16 %v275, %v274
  %v285 = vpack.c.b16 %v277, %v276
  %294 = vmatprep.subr.bf16.mxu0 0
  %295 = vmatpush1.bf16.msra.mxu0 %v278
  %296 = vmatprep.subr.bf16.mxu0 0
  %297 = vmatpush1.bf16.msra.mxu0 %v279
  %298 = vmatprep.subr.bf16.mxu0 0
  %299 = vmatpush1.bf16.msra.mxu0 %v280
  %300 = vmatprep.subr.bf16.mxu0 0
  %301 = vmatpush1.bf16.msra.mxu0 %v281
  %302 = vmatprep.subr.bf16.mxu0 0
  %303 = vmatpush1.bf16.msra.mxu0 %v282
  %304 = vmatprep.subr.bf16.mxu0 0
  %305 = vmatpush1.bf16.msra.mxu0 %v283
  %306 = vmatprep.subr.bf16.mxu0 0
  %307 = vmatpush1.bf16.msra.mxu0 %v284
  %308 = vmatprep.subr.bf16.mxu0 0
  %309 = vmatpush1.bf16.msra.mxu0 %v285
  %310 = vmatprep.subr.bf16.mxu0 0
  %311 = vmatpush1.bf16.msra.mxu0 0
  %312 = vmatprep.subr.bf16.mxu0 0
  %313 = vmatpush1.bf16.msra.mxu0 0
  %314 = vmatprep.subr.bf16.mxu0 0
  %315 = vmatpush1.bf16.msra.mxu0 0
  %316 = vmatprep.subr.bf16.mxu0 0
  %317 = vmatpush1.bf16.msra.mxu0 0
  %318 = vmatprep.subr.bf16.mxu0 0
  %319 = vmatpush1.bf16.msra.mxu0 0
  %320 = vmatprep.subr.bf16.mxu0 0
  %321 = vmatpush1.bf16.msra.mxu0 0
  %322 = vmatprep.subr.bf16.mxu0 0
  %323 = vmatpush1.bf16.msra.mxu0 0
  %324 = vmatprep.subr.bf16.mxu0 0
  %325 = vmatpush1.bf16.msra.mxu0 0
  %326 = vmatprep.mubr.bf16.mxu0 0
  %327 = vmatmul.mubr.bf16.gmra.mrb[0].mxu0 %v221
  %v328 = vpop.f32.mrb[0].mxu0
  %v329 = vadd.f32 %v244, %v328
  %v330 = vpop.f32.mrb[0].mxu0
  %v331 = vpop.f32.mrb[0].mxu0
  %v332 = vadd.f32 %v244, %v331
  %v333 = vpop.f32.mrb[0].mxu0
  %334 = vmatprep.mubr.bf16.mxu0 0
  %335 = vmatmul.mubr.bf16.gmra.mrb[0].mxu0 %v222
  %v336 = vpop.f32.mrb[0].mxu0
  %v337 = vadd.f32 %v244, %v336
  %v338 = vpop.f32.mrb[0].mxu0
  %v339 = vpop.f32.mrb[0].mxu0
  %v340 = vadd.f32 %v244, %v339
  %v341 = vpop.f32.mrb[0].mxu0
  %342 = vdwg.mxu0
  %v343 = vadd.f32 %v34, %v329
  %v344 = vadd.f32 %v37, %v332
  %v345 = vadd.f32 %v40, %v337
  %v346 = vadd.f32 %v43, %v340
  %348 = vrot.lane.b32.xlu0 %v344, 32
  %v349 = vpop.permute.xlu0 %348
  %352 = vrot.lane.b32.xlu0 %v345, 64
  %v353 = vpop.permute.xlu0 %352
  %356 = vrot.lane.b32.xlu0 %v346, 96
  %v357 = vpop.permute.xlu0 %356
  %v359 = vsel %vm45, %v343, %v349
  %vm360 = vcmask 523264
  %v361 = vsel %vm360, %v359, %v353
  %vm362 = vcmask 785408
  %v363 = vsel %vm362, %v361, %v357
  %v364 = vpack.c.bf16 %v363, %v363
  %v365 = vld [vmem:[%s7] sm:$0xf]
  %v366 = vld [vmem:[%s7 + $0x4] sm:$0xf]
  %v367 = vld [vmem:[%s7 + $0x8] sm:$0xf]
  %v368 = vld [vmem:[%s7 + $0xc] sm:$0xf]
  %v369 = vld [vmem:[%s7 + $0x10] sm:$0xf]
  %v370 = vld [vmem:[%s7 + $0x14] sm:$0xf]
  %v371 = vld [vmem:[%s7 + $0x18] sm:$0xf]
  %v372 = vld [vmem:[%s7 + $0x1c] sm:$0xf]
  %v373 = vld [vmem:[%s7 + $0x20] sm:$0xf]
  %v374 = vld [vmem:[%s7 + $0x24] sm:$0xf]
  %v375 = vld [vmem:[%s7 + $0x28] sm:$0xf]
  %v376 = vld [vmem:[%s7 + $0x2c] sm:$0xf]
  %v377 = vld [vmem:[%s7 + $0x30] sm:$0xf]
  %v378 = vld [vmem:[%s7 + $0x34] sm:$0xf]
  %v379 = vld [vmem:[%s7 + $0x38] sm:$0xf]
  %v380 = vld [vmem:[%s7 + $0x3c] sm:$0xf]
  %v381 = vld [vmem:[%s8] sm:$0x1]
  %v383 = vlaneseq
  %v384 = vshrl.u32 %v383, 7
  %v385 = vsub.s32 0, %v384
  %v386 = vrot.slane %v381, %v385
  %v404 = vunpack.c.l.b16 %v365
  %v405 = vunpack.c.l.b16 %v366
  %v406 = vunpack.c.l.b16 %v367
  %v407 = vunpack.c.l.b16 %v368
  %v408 = vunpack.c.l.b16 %v369
  %v409 = vunpack.c.l.b16 %v370
  %v410 = vunpack.c.l.b16 %v371
  %v411 = vunpack.c.l.b16 %v372
  %v412 = vunpack.c.l.b16 %v373
  %v413 = vunpack.c.l.b16 %v374
  %v414 = vunpack.c.l.b16 %v375
  %v415 = vunpack.c.l.b16 %v376
  %v416 = vunpack.c.l.b16 %v377
  %v417 = vunpack.c.l.b16 %v378
  %v418 = vunpack.c.l.b16 %v379
  %v419 = vunpack.c.l.b16 %v380
  %v420 = vpack.c.b16 %v405, %v404
  %v421 = vpack.c.b16 %v407, %v406
  %v422 = vpack.c.b16 %v409, %v408
  %v423 = vpack.c.b16 %v411, %v410
  %v424 = vpack.c.b16 %v413, %v412
  %v425 = vpack.c.b16 %v415, %v414
  %v426 = vpack.c.b16 %v417, %v416
  %v427 = vpack.c.b16 %v419, %v418
  %436 = vmatprep.subr.bf16.mxu0 0
  %437 = vmatpush1.bf16.msra.mxu0 %v420
  %438 = vmatprep.subr.bf16.mxu0 0
  %439 = vmatpush1.bf16.msra.mxu0 %v421
  %440 = vmatprep.subr.bf16.mxu0 0
  %441 = vmatpush1.bf16.msra.mxu0 %v422
  %442 = vmatprep.subr.bf16.mxu0 0
  %443 = vmatpush1.bf16.msra.mxu0 %v423
  %444 = vmatprep.subr.bf16.mxu0 0
  %445 = vmatpush1.bf16.msra.mxu0 %v424
  %446 = vmatprep.subr.bf16.mxu0 0
  %447 = vmatpush1.bf16.msra.mxu0 %v425
  %448 = vmatprep.subr.bf16.mxu0 0
  %449 = vmatpush1.bf16.msra.mxu0 %v426
  %450 = vmatprep.subr.bf16.mxu0 0
  %451 = vmatpush1.bf16.msra.mxu0 %v427
  %452 = vmatprep.subr.bf16.mxu0 0
  %453 = vmatpush1.bf16.msra.mxu0 0
  %454 = vmatprep.subr.bf16.mxu0 0
  %455 = vmatpush1.bf16.msra.mxu0 0
  %456 = vmatprep.subr.bf16.mxu0 0
  %457 = vmatpush1.bf16.msra.mxu0 0
  %458 = vmatprep.subr.bf16.mxu0 0
  %459 = vmatpush1.bf16.msra.mxu0 0
  %460 = vmatprep.subr.bf16.mxu0 0
  %461 = vmatpush1.bf16.msra.mxu0 0
  %462 = vmatprep.subr.bf16.mxu0 0
  %463 = vmatpush1.bf16.msra.mxu0 0
  %464 = vmatprep.subr.bf16.mxu0 0
  %465 = vmatpush1.bf16.msra.mxu0 0
  %466 = vmatprep.subr.bf16.mxu0 0
  %467 = vmatpush1.bf16.msra.mxu0 0
  %468 = vmatprep.mubr.bf16.mxu0 0
  %469 = vmatmul.mubr.bf16.gmra.mrb[0].mxu0 %v364
  %v470 = vpop.f32.mrb[0].mxu0
  %v471 = vadd.f32 %v386, %v470
  %v472 = vpop.f32.mrb[0].mxu0
  %v473 = vpop.f32.mrb[0].mxu0
  %v474 = vpop.f32.mrb[0].mxu0
  %475 = vdwg.mxu0
  %476 = vst [vmem:[%s9] sm:$0xff] %v471
  // Predicated region
  $region38: #{classifier_forward.1} parent=0 // pred_check
    _
  $region39: #{classifier_forward.1} parent=0 // pred_check_branch
    %478 = sbr.rel (0) target = $region41
  $region40: #{classifier_forward.1} parent=0 // pred_region
    _
  $region41: #{classifier_forward.1} parent=0 // pred_fallthru
    _
  // Predicated region
  $region42: #{classifier_forward.1} parent=0 // pred_check
    _
  $region43: #{classifier_forward.1} parent=0 // pred_check_branch
    %480 = sbr.rel (0) target = $region45
  $region44: #{classifier_forward.1} parent=0 // pred_region
    _
  $region45: #{classifier_forward.1} parent=0 // pred_fallthru
    _

</llo_original>
